<compile_context>
chip_gen: v7x
topology: tpu7x:2x2x1
jax: 0.10.0
libtpu: 0.0.40
codegen_flags: <defaults>
</compile_context>

<pallas_src>
import jax
import jax.numpy as jnp
from jax.experimental import pallas as pl
from jax.experimental.pallas import tpu as pltpu


def _linear_kernel(x_ref, w_ref, b_ref, o_ref):
    # VPU multiply with the [1, F] weight broadcast across sublanes, then an
    # XLU reduction over the lane (feature) axis.  Mosaic masks the lane tail
    # (F -> next multiple of 128) because the block spans the full F dim.
    prod = x_ref[...] * w_ref[...]                                   # [tb, F]  (VPU)
    o_ref[...] = jnp.sum(prod, axis=-1, keepdims=True) + b_ref[0]    # [tb, 1]


def binary_classifier_forward(x, weight, bias, *, block_b=2048):
    """Forward pass of nn.Linear(1000, 1): y = x @ W.T + b.

    x:      [B, F] float32
    weight: [1, F] float32 (native PyTorch layout -- NOT transposed)
    bias:   [1]    float32
    returns [B, 1] float32
    """
    B, F = x.shape
    x = x.astype(jnp.float32)
    weight = weight.astype(jnp.float32)
    bias = bias.astype(jnp.float32).reshape(1)

    # Row tile: multiple of 8 sublanes.  Never pad/copy x -- the last batch
    # block may overhang B (masked output writeback discards overhang rows).
    tile_b = min(block_b, pl.cdiv(B, 8) * 8)
    if B >= 512:
        # Ensure the grid has >= 2 steps so both v7x TensorCores get work.
        half_b = pl.cdiv(pl.cdiv(B, 2), 8) * 8
        tile_b = min(tile_b, max(256, half_b))

    grid = (pl.cdiv(B, tile_b),)

    return pl.pallas_call(
        _linear_kernel,
        out_shape=jax.ShapeDtypeStruct((B, 1), jnp.float32),
        grid=grid,
        in_specs=[
            # x row tile; feature block == full F so Mosaic masks the lane tail.
            pl.BlockSpec((tile_b, F), lambda i: (i, 0)),
            # weight, lane-dense, reused by every grid step.
            pl.BlockSpec((1, F), lambda i: (0, 0)),
            # bias scalar in SMEM.
            pl.BlockSpec(memory_space=pltpu.MemorySpace.SMEM),
        ],
        # Direct (tile_b, 1) blocks of the (B, 1) output: tiny masked stores,
        # fully hidden under the x input DMA; no relayout, no wrapper reshape.
        out_specs=pl.BlockSpec((tile_b, 1), lambda i: (i, 0)),
        compiler_params=pltpu.CompilerParams(
            dimension_semantics=("parallel",)),
        cost_estimate=pl.CostEstimate(
            flops=2 * B * F,
            bytes_accessed=(B * F + F + B) * 4,
            transcendentals=0),
    )(x, weight, bias)


if __name__ == "__main__":
    key = jax.random.PRNGKey(0)
    k_x, k_w, k_b = jax.random.split(key, 3)

    B, F = 8, 1000  # in_features fixed by the module (Linear(1000, 1))
    x = jax.random.normal(k_x, (B, F), dtype=jnp.float32)

    # Deterministic parameter init (mimic PyTorch's uniform(-1/sqrt(F), 1/sqrt(F)))
    bound = 1.0 / jnp.sqrt(jnp.float32(F))
    weight = jax.random.uniform(k_w, (1, F), minval=-bound, maxval=bound,
                                dtype=jnp.float32)
    bias = jax.random.uniform(k_b, (1,), minval=-bound, maxval=bound,
                              dtype=jnp.float32)

    out = binary_classifier_forward(x, weight, bias)
    jax.block_until_ready(out)

    # Sanity check against a full-precision JAX reference.
    ref = jnp.einsum("bf,of->bo", x, weight,
                     precision=jax.lax.Precision.HIGHEST) + bias
    assert out.shape == (B, 1)
    assert jnp.allclose(out, ref, atol=1e-5, rtol=1e-5), \
        float(jnp.max(jnp.abs(out - ref)))

    print("KERNEL_OK")
</pallas_src>

<mosaic_0001>
module attributes {stable_mosaic.version = 11 : i64} {
  func.func @_linear_kernel(%arg0: i32, %arg1: memref<8x1000xf32, #tpu.memory_space<vmem>>, %arg2: memref<1x1000xf32, #tpu.memory_space<vmem>>, %arg3: memref<1xf32, #tpu.memory_space<smem>>, %arg4: memref<8x1xf32, #tpu.memory_space<vmem>>) attributes {dimension_semantics = [#tpu.dimension_semantics<parallel>], iteration_bounds = array<i64: 1>, scalar_prefetch = 0 : i64, scratch_operands = 0 : i64, tpu.core_type = #tpu.core_type<tc>, window_params = [{transform_indices = @transform_0, window_bounds = array<i64: 8, 1000>}, {pipeline_mode = #tpu.pipeline_mode<synchronous>, transform_indices = @transform_1, window_bounds = array<i64: 1, 1000>}, {transform_indices = @transform_2, window_bounds = array<i64: 1>}, {transform_indices = @transform_3, window_bounds = array<i64: 8, 1>}]} {
    %c0 = arith.constant 0 : index
    %c0_0 = arith.constant 0 : index
    %0 = vector.load %arg1[%c0, %c0_0] : memref<8x1000xf32, #tpu.memory_space<vmem>>, vector<8x1000xf32>
    %c0_1 = arith.constant 0 : index
    %c0_2 = arith.constant 0 : index
    %1 = vector.load %arg2[%c0_1, %c0_2] : memref<1x1000xf32, #tpu.memory_space<vmem>>, vector<1x1000xf32>
    %2 = vector.broadcast %1 : vector<1x1000xf32> to vector<8x1000xf32>
    %3 = arith.mulf %0, %2 : vector<8x1000xf32>
    %cst = arith.constant dense<0.000000e+00> : vector<8xf32>
    %4 = vector.multi_reduction <add>, %3, %cst [1] : vector<8x1000xf32> to vector<8xf32>
    %5 = vector.shape_cast %4 : vector<8xf32> to vector<8x1xf32>
    %c0_3 = arith.constant 0 : index
    %6 = memref.load %arg3[%c0_3] : memref<1xf32, #tpu.memory_space<smem>>
    %7 = vector.broadcast %6 : f32 to vector<8x1xf32>
    %8 = arith.addf %5, %7 : vector<8x1xf32>
    %c0_4 = arith.constant 0 : index
    %c0_5 = arith.constant 0 : index
    %9 = vector.load %arg4[%c0_4, %c0_5] : memref<8x1xf32, #tpu.memory_space<vmem>>, vector<8x1xf32>
    tpu.vector_store %arg4[%c0_4, %c0_5], %8 {strides = array<i32>} : memref<8x1xf32, #tpu.memory_space<vmem>>, vector<8x1xf32>,
    return
  }
  func.func @transform_0(%arg0: i32) -> (i32, i32) {
    %c0_i32 = arith.constant 0 : i32
    %c0_i32_0 = arith.constant 0 : i32
    return %arg0, %c0_i32 : i32, i32
  }
  func.func @transform_1(%arg0: i32) -> (i32, i32) {
    %c0_i32 = arith.constant 0 : i32
    %c0_i32_0 = arith.constant 0 : i32
    %c0_i32_1 = arith.constant 0 : i32
    return %c0_i32, %c0_i32_0 : i32, i32
  }
  func.func @transform_2(%arg0: i32) -> i32 {
    %c0_i32 = arith.constant 0 : i32
    %c0_i32_0 = arith.constant 0 : i32
    return %c0_i32 : i32
  }
  func.func @transform_3(%arg0: i32) -> (i32, i32) {
    %c0_i32 = arith.constant 0 : i32
    %c0_i32_0 = arith.constant 0 : i32
    return %arg0, %c0_i32 : i32, i32
  }
}

</mosaic_0001>

<llo_original>
// kernel: tpu_custom_call.1
$region0: #{tpu_custom_call.1}
  #allocation0 [shape = 'u32[]', space=smem, size = 0x4, offset = 0x4, fixed_abs, tag = 'smem constant byte address 0x4 - core index']
  #allocation1 [shape = 'u32[144,128]{1,0:T(1,128)}', space=vmem, size = 0x12000, scoped, tag = 'internal scratch']
  #allocation2 [shape = 'f32[1]{0:T(128)S(6)}', space=smem, size = 0x200, scoped, tag = 'scoped memory for tpu_custom_call.1']
  %s0 = inlined_call_operand.hbm [shape: f32[8,1000], index: 0, kind: input, shape index: {}]
  %s1 = inlined_call_operand.hbm [shape: f32[1,1000], index: 1, kind: input, shape index: {}]
  %s2 = inlined_call_operand.<no memory space> [shape: f32[1], index: 2, kind: input, shape index: {}]
  %s3 = inlined_call_operand.vmem [shape: f32[8,1], index: 3, kind: output, shape index: {}]
  %s4 = sld [smem:[#allocation0]]
  $region30: #{tpu_custom_call.1} parent=0
    _
  %s6 = ssub.s32 1, %s4
  %s7 = scalar_select 0, %s6, %s4
  %8 = sst [smem:[#allocation2]] %s2
  $region1: #{tpu_custom_call.1} parent=0
    #allocation3 [shape = 'u8[32768]{0}', space=vmem, size = 0x8000, scoped, tag = 'input window, operand 0, single buffered']
    #allocation4 [shape = 's32[1]{0}', space=sflag, size = 0x4, scoped, tag = 'scoped memory for tpu_custom_call.1']
    #allocation5 [shape = 'u8[4096]{0}', space=vmem, size = 0x1000, scoped, tag = 'input window, operand 1, single buffered']
    #allocation6 [shape = 's32[1]{0}', space=sflag, size = 0x4, scoped, tag = 'scoped memory for tpu_custom_call.1']
    %9 = vsyncpa [#allocation4], 0
    %10 = vsyncpa [#allocation6], 0
    // Predicated region
    $region2: #{tpu_custom_call.1} parent=1 // pred_check
      _
    $region3: #{tpu_custom_call.1} parent=1 // pred_check_branch
      %12 = sbr.rel (0) target = $region5
    $region4: #{tpu_custom_call.1} parent=1 // pred_region
      %s14 = ssub.s32 1024, 1024
      %15 = vsyncadd [#allocation4], %s14
      %s17 = sshll.u32 [#allocation3], 4
      %s18 = int_to_ptr.vmem [resolvable:$true] %s17
      %20 = dma.hbm_to_vmem [thread:$0]  %s0, 1024, %s18, [#allocation4]
    $region5: #{tpu_custom_call.1} parent=1 // pred_fallthru
      _
    // Predicated region
    $region6: #{tpu_custom_call.1} parent=1 // pred_check
      _
    $region7: #{tpu_custom_call.1} parent=1 // pred_check_branch
      %22 = sbr.rel (0) target = $region9
    $region8: #{tpu_custom_call.1} parent=1 // pred_region
      %s24 = ssub.s32 128, 128
      %25 = vsyncadd [#allocation6], %s24
      %s27 = sshll.u32 [#allocation5], 4
      %s28 = int_to_ptr.vmem [resolvable:$true] %s27
      %30 = dma.hbm_to_vmem [thread:$0]  %s1, 128, %s28, [#allocation6]
    $region9: #{tpu_custom_call.1} parent=1 // pred_fallthru
      _
    // Predicated region
    $region10: #{tpu_custom_call.1} parent=1 // pred_check
      _
    $region11: #{tpu_custom_call.1} parent=1 // pred_check_branch
      %32 = sbr.rel (0) target = $region13
    $region12: #{tpu_custom_call.1} parent=1 // pred_region
      _
    $region13: #{tpu_custom_call.1} parent=1 // pred_fallthru
      _
    // Predicated region
    $region14: #{tpu_custom_call.1} parent=1 // pred_check
      _
    $region15: #{tpu_custom_call.1} parent=1 // pred_check_branch
      %34 = sbr.rel (0) target = $region17
    $region16: #{tpu_custom_call.1} parent=1 // pred_region
      %35 = dma.done [#allocation4], 1024
    $region17: #{tpu_custom_call.1} parent=1 // pred_fallthru
      _
    // Predicated region
    $region18: #{tpu_custom_call.1} parent=1 // pred_check
      _
    $region19: #{tpu_custom_call.1} parent=1 // pred_check_branch
      %37 = sbr.rel (0) target = $region21
    $region20: #{tpu_custom_call.1} parent=1 // pred_region
      %38 = dma.done [#allocation6], 128
    $region21: #{tpu_custom_call.1} parent=1 // pred_fallthru
      _
    %v39 = vld [vmem:[#allocation3] sm:$0xff]
    %v40 = vld [vmem:[#allocation3 + $0x8] sm:$0xff]
    %v41 = vld [vmem:[#allocation3 + $0x10] sm:$0xff]
    %v42 = vld [vmem:[#allocation3 + $0x18] sm:$0xff]
    %v43 = vld [vmem:[#allocation3 + $0x20] sm:$0xff]
    %v44 = vld [vmem:[#allocation3 + $0x28] sm:$0xff]
    %v45 = vld [vmem:[#allocation3 + $0x30] sm:$0xff]
    %v46 = vld [vmem:[#allocation3 + $0x38] sm:$0xff]
    %v47 = vld [vmem:[#allocation5] sm:$0xff]
    %v49 = vlaneseq
    %v50 = vshrl.u32 %v49, 7
    %v51 = vsub.s32 0, %v50
    %v52 = vrot.slane %v47, %v51
    %v53 = vlaneseq
    %v54 = vshrl.u32 %v53, 7
    %v55 = vsub.s32 1, %v54
    %v56 = vrot.slane %v47, %v55
    %v57 = vlaneseq
    %v58 = vshrl.u32 %v57, 7
    %v59 = vsub.s32 2, %v58
    %v60 = vrot.slane %v47, %v59
    %v61 = vlaneseq
    %v62 = vshrl.u32 %v61, 7
    %v63 = vsub.s32 3, %v62
    %v64 = vrot.slane %v47, %v63
    %v65 = vlaneseq
    %v66 = vshrl.u32 %v65, 7
    %v67 = vsub.s32 4, %v66
    %v68 = vrot.slane %v47, %v67
    %v69 = vlaneseq
    %v70 = vshrl.u32 %v69, 7
    %v71 = vsub.s32 5, %v70
    %v72 = vrot.slane %v47, %v71
    %v73 = vlaneseq
    %v74 = vshrl.u32 %v73, 7
    %v75 = vsub.s32 6, %v74
    %v76 = vrot.slane %v47, %v75
    %v77 = vlaneseq
    %v78 = vshrl.u32 %v77, 7
    %v79 = vsub.s32 7, %v78
    %v80 = vrot.slane %v47, %v79
    %v89 = vmul.f32 %v39, %v52
    %v90 = vmul.f32 %v40, %v56
    %v91 = vmul.f32 %v41, %v60
    %v92 = vmul.f32 %v42, %v64
    %v93 = vmul.f32 %v43, %v68
    %v94 = vmul.f32 %v44, %v72
    %v95 = vmul.f32 %v45, %v76
    %v96 = vmul.f32 %v46, %v80
    %v97 = vadd.f32 %v89, %v90
    %v98 = vadd.f32 %v97, %v91
    %v99 = vadd.f32 %v98, %v92
    %v100 = vadd.f32 %v99, %v93
    %v101 = vadd.f32 %v100, %v94
    %v102 = vadd.f32 %v101, %v95
    %vm103 = vcmask 850944
    %v104 = vsel %vm103, %v96, 0.0
    %v105 = vadd.f32 %v102, %v104
    %106 = vadd.xlane.f32.xlu0 %v105
    %v107 = vpop.xlane.xlu0 %106
    %s108 = sld [smem:[#allocation2]]
    %v109 = vstv %s108
    %v110 = vadd.f32 %v107, %v109
    %vm111 = vcmask 7168
    %112 = vst.msk [vmem:[%s3] sm:$0xff] %vm111, %v110
    // Predicated region
    $region22: #{tpu_custom_call.1} parent=1 // pred_check
      _
    $region23: #{tpu_custom_call.1} parent=1 // pred_check_branch
      %114 = sbr.rel (0) target = $region25
    $region24: #{tpu_custom_call.1} parent=1 // pred_region
      _
    $region25: #{tpu_custom_call.1} parent=1 // pred_fallthru
      _
    // Predicated region
    $region26: #{tpu_custom_call.1} parent=1 // pred_check
      _
    $region27: #{tpu_custom_call.1} parent=1 // pred_check_branch
      %116 = sbr.rel (0) target = $region29
    $region28: #{tpu_custom_call.1} parent=1 // pred_region
      _
    $region29: #{tpu_custom_call.1} parent=1 // pred_fallthru
      _
    %117 = vsyncpa [#allocation4], 1
    %118 = vsyncpa [#allocation6], 1

</llo_original>
